<compile_context>
chip_gen: v7x
topology: tpu7x:2x2x1
jax: 0.10.0
libtpu: 0.0.40
codegen_flags: <defaults>
</compile_context>

<pallas_src>
import math

import jax
import jax.numpy as jnp
import numpy as np
from jax.experimental import pallas as pl
from jax.experimental.pallas import tpu as pltpu

EMBED_DIM = 32


def scorenet_kernel(in_ref, wg_ref, wsq_ref, wf_ref, w5_ref,
                    bsq_ref, bf_ref, b5_ref, out_ref):
    f32 = jnp.float32
    bf16 = jnp.bfloat16
    E = wsq_ref.shape[1]                      # 32

    slab = in_ref[...]                        # (16, tb) f32
    x = slab[0:6, :]                          # (6, tb)
    p = slab[3:6, :]                          # (3, tb)
    t = slab[6:7, :]                          # (1, tb)
    lf = slab[7:16, :]                        # (9, tb) row-major 3x3 per sample

    def W(i):                                 # (E, E) bf16 weight slice
        return wsq_ref[pl.ds(i * E, E), :]

    def Bv(i):                                # (E, 1) f32 bias slice
        return bsq_ref[pl.ds(i * E, E), :]

    # Gaussian Fourier projection (f32 transcendentals on the EUP).
    proj = wg_ref[...] * t * (2.0 * math.pi)                          # (E//2, tb)
    scat = jnp.concatenate([jnp.sin(proj), jnp.cos(proj)], axis=0)    # (E, tb)

    # embed = sigmoid(W_emb @ [sin;cos] + b_emb)      (bf16 dot, f32 acc)
    embed = jax.nn.sigmoid(
        jnp.dot(W(0), scat.astype(bf16), preferred_element_type=f32) + Bv(0))

    # Fused projection: [[w1, w_le], [0, w_le2]] @ [x; embed]
    #   rows 0:E  -> lin1(x) + lin_embed(embed)   (bias b1+b_le pre-fused)
    #   rows E:2E -> lin_embed2(embed)            (bias b_le2)
    xe = jnp.concatenate([x, embed], axis=0).astype(bf16)             # (6+E, tb)
    fproj = jnp.dot(wf_ref[...], xe, preferred_element_type=f32) + bf_ref[...]
    h = fproj[0:E, :]                                                 # (E, tb)
    emb2 = fproj[E:2 * E, :]                                          # (E, tb)

    # h = sigmoid(lin2(h))
    h = jax.nn.sigmoid(
        jnp.dot(W(1), h.astype(bf16), preferred_element_type=f32) + Bv(1))
    # h = sigmoid(lin3(h)) + lin_embed2(embed)
    h = jax.nn.sigmoid(
        jnp.dot(W(2), h.astype(bf16), preferred_element_type=f32) + Bv(2)) + emb2
    # h = sigmoid(lin4(h))
    h = jax.nn.sigmoid(
        jnp.dot(W(3), h.astype(bf16), preferred_element_type=f32) + Bv(3))
    # h = lin5(h)  -> (3, tb)
    h = jnp.dot(w5_ref[...], h.astype(bf16), preferred_element_type=f32) + b5_ref[...]

    # out = L @ (h - p) per sample, as full-lane VPU FMAs; direct row stores
    # (no sublane concat before the unmasked lane-dense store).
    d = h - p                                                          # (3, tb)
    d0, d1, d2 = d[0:1, :], d[1:2, :], d[2:3, :]
    out_ref[0:1, :] = lf[0:1, :] * d0 + lf[1:2, :] * d1 + lf[2:3, :] * d2
    out_ref[1:2, :] = lf[3:4, :] * d0 + lf[4:5, :] * d1 + lf[5:6, :] * d2
    out_ref[2:3, :] = lf[6:7, :] * d0 + lf[7:8, :] * d1 + lf[8:9, :] * d2


def init_params(key, embed_dim=EMBED_DIM):
    """Parameters in native PyTorch layout: W (out, in), b (out,)."""
    ks = jax.random.split(key, 17)

    def linear(kw, kb, fan_in, fan_out):
        bound = 1.0 / math.sqrt(fan_in)
        w = jax.random.uniform(kw, (fan_out, fan_in), jnp.float32, -bound, bound)
        b = jax.random.uniform(kb, (fan_out,), jnp.float32, -bound, bound)
        return w, b

    p = {}
    p["w_gfp"] = jax.random.normal(ks[0], (embed_dim // 2,), jnp.float32) * 30.0
    p["w_emb"], p["b_emb"] = linear(ks[1], ks[2], embed_dim, embed_dim)
    p["w_le"], p["b_le"] = linear(ks[3], ks[4], embed_dim, embed_dim)
    p["w_le2"], p["b_le2"] = linear(ks[5], ks[6], embed_dim, embed_dim)
    p["w1"], p["b1"] = linear(ks[7], ks[8], 6, embed_dim)
    p["w2"], p["b2"] = linear(ks[9], ks[10], embed_dim, embed_dim)
    p["w3"], p["b3"] = linear(ks[11], ks[12], embed_dim, embed_dim)
    p["w4"], p["b4"] = linear(ks[13], ks[14], embed_dim, embed_dim)
    p["w5"], p["b5"] = linear(ks[15], ks[16], embed_dim, 3)
    return p


def pack_params(params, embed_dim=EMBED_DIM):
    """Pack the 18 parameter tensors into 7 kernel inputs.

    MXU-feeding weights are stored as bf16; biases / GFP frequencies stay f32.
    """
    E = embed_dim
    bf16 = jnp.bfloat16
    col = lambda b: b.reshape(-1, 1).astype(jnp.float32)

    # Square-weight slab, order: 0 w_emb, 1 w2, 2 w3, 3 w4
    wsq = jnp.concatenate(
        [params["w_emb"], params["w2"], params["w3"], params["w4"]],
        axis=0).astype(bf16)                                          # (4E, E)
    bsq = jnp.concatenate(
        [col(params["b_emb"]), col(params["b2"]),
         col(params["b3"]), col(params["b4"])], axis=0)               # (4E, 1)

    # Fused block matrix [[w1, w_le], [0, w_le2]] -> (2E, 6+E)
    top = jnp.concatenate(
        [params["w1"].astype(jnp.float32),
         params["w_le"].astype(jnp.float32)], axis=1)                 # (E, 6+E)
    bot = jnp.concatenate(
        [jnp.zeros((E, 6), jnp.float32),
         params["w_le2"].astype(jnp.float32)], axis=1)                # (E, 6+E)
    wf = jnp.concatenate([top, bot], axis=0).astype(bf16)             # (2E, 6+E)
    bfv = jnp.concatenate(
        [col(params["b1"] + params["b_le"]),                          # fused bias
         col(params["b_le2"])], axis=0)                               # (2E, 1)

    wg = params["w_gfp"].reshape(E // 2, 1).astype(jnp.float32)       # (E//2, 1)
    w5 = params["w5"].astype(bf16)                                    # (3, E)
    b5 = col(params["b5"])                                            # (3, 1)
    return (wg, wsq, wf, w5, bsq, bfv, b5)


def scorenet_forward(params, x, t, L, G=None, tb=4096):
    # G is unused in the reference forward pass.
    B = x.shape[0]
    packed = pack_params(params, EMBED_DIM)

    # Lane-dense input slab (16, B): rows 0-5 x^T, row 6 t, rows 7-15 L flat^T.
    slab = jnp.concatenate(
        [x.astype(jnp.float32).T,
         t.reshape(1, B).astype(jnp.float32),
         L.reshape(B, 9).astype(jnp.float32).T], axis=0)              # (16, B)

    # Batch tile: multiple of 128, at most tb; when B > 128, cap the tile so
    # the grid has at least 2 steps (keeps both v7x TensorCores busy via the
    # "parallel" axis).  Batch (lanes) is zero-padded to a tile multiple.
    tb_cap = max(128, (tb // 128) * 128)
    if B > 128:
        half = pl.cdiv(pl.cdiv(B, 2), 128) * 128
        tb_cap = min(tb_cap, half)
    tb_eff = min(tb_cap, pl.cdiv(B, 128) * 128)
    Bp = pl.cdiv(B, tb_eff) * tb_eff
    if Bp != B:
        slab = jnp.pad(slab, ((0, 0), (0, Bp - B)))

    def lane_spec(rows):
        return pl.BlockSpec((rows, tb_eff), lambda i: (0, i))

    def full_spec(shape):
        return pl.BlockSpec(shape, lambda i: (0, 0))   # resident across steps

    out = pl.pallas_call(
        scorenet_kernel,
        out_shape=jax.ShapeDtypeStruct((3, Bp), jnp.float32),
        grid=(Bp // tb_eff,),
        in_specs=[lane_spec(16)] + [full_spec(p.shape) for p in packed],
        out_specs=lane_spec(3),
        compiler_params=pltpu.CompilerParams(
            dimension_semantics=("parallel",)),
    )(slab, *packed)
    return out[:, :B].T                                               # (B, 3)


def scorenet_ref(params, x, t, L):
    """Pure-JAX f32 reference mirroring the PyTorch forward exactly."""
    proj = t[:, None] * params["w_gfp"][None, :] * 2.0 * jnp.pi
    emb_cat = jnp.concatenate([jnp.sin(proj), jnp.cos(proj)], axis=-1)
    embed = jax.nn.sigmoid(emb_cat @ params["w_emb"].T + params["b_emb"])
    h = x @ params["w1"].T + params["b1"]
    h = h + embed @ params["w_le"].T + params["b_le"]
    h = jax.nn.sigmoid(h @ params["w2"].T + params["b2"])
    h = (jax.nn.sigmoid(h @ params["w3"].T + params["b3"])
         + embed @ params["w_le2"].T + params["b_le2"])
    h = jax.nn.sigmoid(h @ params["w4"].T + params["b4"])
    h = h @ params["w5"].T + params["b5"]
    p = x[:, 3:]
    return jnp.squeeze(L @ (h - p)[..., None], -1)


if __name__ == "__main__":
    key = jax.random.PRNGKey(0)
    kp, kx, kt, kL = jax.random.split(key, 4)

    params = init_params(kp, EMBED_DIM)

    # bf16 MXU inputs (f32 accumulation) -> loosened tolerance vs f32 ref.
    RTOL, ATOL = 3e-2, 3e-2

    # Small deterministic test (batch padded up to one 128-lane tile).
    B = 8
    x = jax.random.normal(kx, (B, 6), jnp.float32)
    t = jax.random.uniform(kt, (B,), jnp.float32, minval=1e-3, maxval=1.0)
    L = jax.random.normal(kL, (B, 3, 3), jnp.float32)
    G = jnp.zeros((B,), jnp.float32)  # unused by the forward pass

    out = jax.block_until_ready(scorenet_forward(params, x, t, L, G))
    ref = jax.block_until_ready(scorenet_ref(params, x, t, L))
    np.testing.assert_allclose(np.asarray(out), np.asarray(ref),
                               rtol=RTOL, atol=ATOL)

    # Non-multiple-of-tile batch exercising grid >= 2 (v7x both-core path)
    # plus lane padding; also an explicit small-tile run (grid of 3).
    B2 = 300
    kx2, kt2, kL2 = jax.random.split(kp, 3)
    x2 = jax.random.normal(kx2, (B2, 6), jnp.float32)
    t2 = jax.random.uniform(kt2, (B2,), jnp.float32, minval=1e-3, maxval=1.0)
    L2 = jax.random.normal(kL2, (B2, 3, 3), jnp.float32)
    ref2 = jax.block_until_ready(scorenet_ref(params, x2, t2, L2))

    out2 = jax.block_until_ready(scorenet_forward(params, x2, t2, L2))
    np.testing.assert_allclose(np.asarray(out2), np.asarray(ref2),
                               rtol=RTOL, atol=ATOL)

    out3 = jax.block_until_ready(scorenet_forward(params, x2, t2, L2, tb=128))
    np.testing.assert_allclose(np.asarray(out3), np.asarray(ref2),
                               rtol=RTOL, atol=ATOL)

    print("KERNEL_OK")
</pallas_src>

<mosaic_0001>
module attributes {stable_mosaic.version = 11 : i64} {
  func.func @scorenet_kernel(%arg0: i32, %arg1: memref<16x128xf32, #tpu.memory_space<vmem>>, %arg2: memref<16x1xf32, #tpu.memory_space<vmem>>, %arg3: memref<128x32xbf16, #tpu.memory_space<vmem>>, %arg4: memref<64x38xbf16, #tpu.memory_space<vmem>>, %arg5: memref<3x32xbf16, #tpu.memory_space<vmem>>, %arg6: memref<128x1xf32, #tpu.memory_space<vmem>>, %arg7: memref<64x1xf32, #tpu.memory_space<vmem>>, %arg8: memref<3x1xf32, #tpu.memory_space<vmem>>, %arg9: memref<3x128xf32, #tpu.memory_space<vmem>>) attributes {dimension_semantics = [#tpu.dimension_semantics<parallel>], iteration_bounds = array<i64: 1>, scalar_prefetch = 0 : i64, scratch_operands = 0 : i64, tpu.core_type = #tpu.core_type<tc>, window_params = [{transform_indices = @transform_0, window_bounds = array<i64: 16, 128>}, {pipeline_mode = #tpu.pipeline_mode<synchronous>, transform_indices = @transform_1, window_bounds = array<i64: 16, 1>}, {pipeline_mode = #tpu.pipeline_mode<synchronous>, transform_indices = @transform_2, window_bounds = array<i64: 128, 32>}, {pipeline_mode = #tpu.pipeline_mode<synchronous>, transform_indices = @transform_3, window_bounds = array<i64: 64, 38>}, {pipeline_mode = #tpu.pipeline_mode<synchronous>, transform_indices = @transform_4, window_bounds = array<i64: 3, 32>}, {pipeline_mode = #tpu.pipeline_mode<synchronous>, transform_indices = @transform_5, window_bounds = array<i64: 128, 1>}, {pipeline_mode = #tpu.pipeline_mode<synchronous>, transform_indices = @transform_6, window_bounds = array<i64: 64, 1>}, {pipeline_mode = #tpu.pipeline_mode<synchronous>, transform_indices = @transform_7, window_bounds = array<i64: 3, 1>}, {transform_indices = @transform_8, window_bounds = array<i64: 3, 128>}]} {
    %c0 = arith.constant 0 : index
    %c0_0 = arith.constant 0 : index
    %0 = vector.load %arg1[%c0, %c0_0] : memref<16x128xf32, #tpu.memory_space<vmem>>, vector<16x128xf32>
    %1 = vector.extract_strided_slice %0 {offsets = [0, 0], sizes = [6, 128], strides = [1, 1]} : vector<16x128xf32> to vector<6x128xf32>
    %2 = vector.extract_strided_slice %0 {offsets = [3, 0], sizes = [3, 128], strides = [1, 1]} : vector<16x128xf32> to vector<3x128xf32>
    %3 = vector.extract_strided_slice %0 {offsets = [6, 0], sizes = [1, 128], strides = [1, 1]} : vector<16x128xf32> to vector<1x128xf32>
    %4 = vector.extract_strided_slice %0 {offsets = [7, 0], sizes = [9, 128], strides = [1, 1]} : vector<16x128xf32> to vector<9x128xf32>
    %c0_1 = arith.constant 0 : index
    %c0_2 = arith.constant 0 : index
    %5 = vector.load %arg2[%c0_1, %c0_2] : memref<16x1xf32, #tpu.memory_space<vmem>>, vector<16x1xf32>
    %6 = vector.broadcast %5 : vector<16x1xf32> to vector<16x128xf32>
    %7 = vector.broadcast %3 : vector<1x128xf32> to vector<16x128xf32>
    %8 = arith.mulf %6, %7 : vector<16x128xf32>
    %cst = arith.constant 6.28318548 : f32
    %9 = vector.broadcast %cst : f32 to vector<16x128xf32>
    %10 = arith.mulf %8, %9 : vector<16x128xf32>
    %11 = math.sin %10 : vector<16x128xf32>
    %12 = math.cos %10 : vector<16x128xf32>
    %13 = tpu.concatenate %11, %12 in 0 : vector<16x128xf32>, vector<16x128xf32> -> vector<32x128xf32>
    %c0_3 = arith.constant 0 : index
    %c0_4 = arith.constant 0 : index
    %14 = vector.load %arg3[%c0_3, %c0_4] : memref<128x32xbf16, #tpu.memory_space<vmem>>, vector<32x32xbf16>
    %15 = arith.truncf %13 : vector<32x128xf32> to vector<32x128xbf16>
    %cst_5 = arith.constant dense<0.000000e+00> : vector<32x128xf32>
    %16 = tpu.matmul %14, %15, %cst_5 {dimension_numbers = #tpu.dot_dimension_numbers<[1], [0], [0], [1], [0, 0, 1, 1], [], []>} : vector<32x32xbf16>, vector<32x128xbf16>, vector<32x128xf32> -> vector<32x128xf32>
    %c0_6 = arith.constant 0 : index
    %c0_7 = arith.constant 0 : index
    %17 = vector.load %arg6[%c0_6, %c0_7] : memref<128x1xf32, #tpu.memory_space<vmem>>, vector<32x1xf32>
    %18 = vector.broadcast %17 : vector<32x1xf32> to vector<32x128xf32>
    %19 = arith.addf %16, %18 : vector<32x128xf32>
    %20 = arith.negf %19 : vector<32x128xf32>
    %21 = math.exp %20 : vector<32x128xf32>
    %cst_8 = arith.constant 1.000000e+00 : f32
    %22 = vector.broadcast %cst_8 : f32 to vector<32x128xf32>
    %23 = arith.addf %22, %21 : vector<32x128xf32>
    %24 = arith.divf %22, %23 : vector<32x128xf32>
    %25 = tpu.concatenate %1, %24 in 0 : vector<6x128xf32>, vector<32x128xf32> -> vector<38x128xf32>
    %26 = arith.truncf %25 : vector<38x128xf32> to vector<38x128xbf16>
    %c0_9 = arith.constant 0 : index
    %c0_10 = arith.constant 0 : index
    %27 = vector.load %arg4[%c0_9, %c0_10] : memref<64x38xbf16, #tpu.memory_space<vmem>>, vector<64x38xbf16>
    %cst_11 = arith.constant dense<0.000000e+00> : vector<64x128xf32>
    %28 = tpu.matmul %27, %26, %cst_11 {dimension_numbers = #tpu.dot_dimension_numbers<[1], [0], [0], [1], [0, 0, 1, 1], [], []>} : vector<64x38xbf16>, vector<38x128xbf16>, vector<64x128xf32> -> vector<64x128xf32>
    %c0_12 = arith.constant 0 : index
    %c0_13 = arith.constant 0 : index
    %29 = vector.load %arg7[%c0_12, %c0_13] : memref<64x1xf32, #tpu.memory_space<vmem>>, vector<64x1xf32>
    %30 = vector.broadcast %29 : vector<64x1xf32> to vector<64x128xf32>
    %31 = arith.addf %28, %30 : vector<64x128xf32>
    %32 = vector.extract_strided_slice %31 {offsets = [0, 0], sizes = [32, 128], strides = [1, 1]} : vector<64x128xf32> to vector<32x128xf32>
    %33 = vector.extract_strided_slice %31 {offsets = [32, 0], sizes = [32, 128], strides = [1, 1]} : vector<64x128xf32> to vector<32x128xf32>
    %c32 = arith.constant 32 : index
    %c0_14 = arith.constant 0 : index
    %34 = vector.load %arg3[%c32, %c0_14] : memref<128x32xbf16, #tpu.memory_space<vmem>>, vector<32x32xbf16>
    %35 = arith.truncf %32 : vector<32x128xf32> to vector<32x128xbf16>
    %cst_15 = arith.constant dense<0.000000e+00> : vector<32x128xf32>
    %36 = tpu.matmul %34, %35, %cst_15 {dimension_numbers = #tpu.dot_dimension_numbers<[1], [0], [0], [1], [0, 0, 1, 1], [], []>} : vector<32x32xbf16>, vector<32x128xbf16>, vector<32x128xf32> -> vector<32x128xf32>
    %c32_16 = arith.constant 32 : index
    %c0_17 = arith.constant 0 : index
    %37 = vector.load %arg6[%c32_16, %c0_17] : memref<128x1xf32, #tpu.memory_space<vmem>>, vector<32x1xf32>
    %38 = vector.broadcast %37 : vector<32x1xf32> to vector<32x128xf32>
    %39 = arith.addf %36, %38 : vector<32x128xf32>
    %40 = arith.negf %39 : vector<32x128xf32>
    %41 = math.exp %40 : vector<32x128xf32>
    %cst_18 = arith.constant 1.000000e+00 : f32
    %42 = vector.broadcast %cst_18 : f32 to vector<32x128xf32>
    %43 = arith.addf %42, %41 : vector<32x128xf32>
    %44 = arith.divf %42, %43 : vector<32x128xf32>
    %c64 = arith.constant 64 : index
    %c0_19 = arith.constant 0 : index
    %45 = vector.load %arg3[%c64, %c0_19] : memref<128x32xbf16, #tpu.memory_space<vmem>>, vector<32x32xbf16>
    %46 = arith.truncf %44 : vector<32x128xf32> to vector<32x128xbf16>
    %cst_20 = arith.constant dense<0.000000e+00> : vector<32x128xf32>
    %47 = tpu.matmul %45, %46, %cst_20 {dimension_numbers = #tpu.dot_dimension_numbers<[1], [0], [0], [1], [0, 0, 1, 1], [], []>} : vector<32x32xbf16>, vector<32x128xbf16>, vector<32x128xf32> -> vector<32x128xf32>
    %c64_21 = arith.constant 64 : index
    %c0_22 = arith.constant 0 : index
    %48 = vector.load %arg6[%c64_21, %c0_22] : memref<128x1xf32, #tpu.memory_space<vmem>>, vector<32x1xf32>
    %49 = vector.broadcast %48 : vector<32x1xf32> to vector<32x128xf32>
    %50 = arith.addf %47, %49 : vector<32x128xf32>
    %51 = arith.negf %50 : vector<32x128xf32>
    %52 = math.exp %51 : vector<32x128xf32>
    %cst_23 = arith.constant 1.000000e+00 : f32
    %53 = vector.broadcast %cst_23 : f32 to vector<32x128xf32>
    %54 = arith.addf %53, %52 : vector<32x128xf32>
    %55 = arith.divf %53, %54 : vector<32x128xf32>
    %56 = arith.addf %55, %33 : vector<32x128xf32>
    %c96 = arith.constant 96 : index
    %c0_24 = arith.constant 0 : index
    %57 = vector.load %arg3[%c96, %c0_24] : memref<128x32xbf16, #tpu.memory_space<vmem>>, vector<32x32xbf16>
    %58 = arith.truncf %56 : vector<32x128xf32> to vector<32x128xbf16>
    %cst_25 = arith.constant dense<0.000000e+00> : vector<32x128xf32>
    %59 = tpu.matmul %57, %58, %cst_25 {dimension_numbers = #tpu.dot_dimension_numbers<[1], [0], [0], [1], [0, 0, 1, 1], [], []>} : vector<32x32xbf16>, vector<32x128xbf16>, vector<32x128xf32> -> vector<32x128xf32>
    %c96_26 = arith.constant 96 : index
    %c0_27 = arith.constant 0 : index
    %60 = vector.load %arg6[%c96_26, %c0_27] : memref<128x1xf32, #tpu.memory_space<vmem>>, vector<32x1xf32>
    %61 = vector.broadcast %60 : vector<32x1xf32> to vector<32x128xf32>
    %62 = arith.addf %59, %61 : vector<32x128xf32>
    %63 = arith.negf %62 : vector<32x128xf32>
    %64 = math.exp %63 : vector<32x128xf32>
    %cst_28 = arith.constant 1.000000e+00 : f32
    %65 = vector.broadcast %cst_28 : f32 to vector<32x128xf32>
    %66 = arith.addf %65, %64 : vector<32x128xf32>
    %67 = arith.divf %65, %66 : vector<32x128xf32>
    %c0_29 = arith.constant 0 : index
    %c0_30 = arith.constant 0 : index
    %68 = vector.load %arg5[%c0_29, %c0_30] : memref<3x32xbf16, #tpu.memory_space<vmem>>, vector<3x32xbf16>
    %69 = arith.truncf %67 : vector<32x128xf32> to vector<32x128xbf16>
    %cst_31 = arith.constant dense<0.000000e+00> : vector<3x128xf32>
    %70 = tpu.matmul %68, %69, %cst_31 {dimension_numbers = #tpu.dot_dimension_numbers<[1], [0], [0], [1], [0, 0, 1, 1], [], []>} : vector<3x32xbf16>, vector<32x128xbf16>, vector<3x128xf32> -> vector<3x128xf32>
    %c0_32 = arith.constant 0 : index
    %c0_33 = arith.constant 0 : index
    %71 = vector.load %arg8[%c0_32, %c0_33] : memref<3x1xf32, #tpu.memory_space<vmem>>, vector<3x1xf32>
    %72 = vector.broadcast %71 : vector<3x1xf32> to vector<3x128xf32>
    %73 = arith.addf %70, %72 : vector<3x128xf32>
    %74 = arith.subf %73, %2 : vector<3x128xf32>
    %75 = vector.extract_strided_slice %74 {offsets = [0, 0], sizes = [1, 128], strides = [1, 1]} : vector<3x128xf32> to vector<1x128xf32>
    %76 = vector.extract_strided_slice %74 {offsets = [1, 0], sizes = [1, 128], strides = [1, 1]} : vector<3x128xf32> to vector<1x128xf32>
    %77 = vector.extract_strided_slice %74 {offsets = [2, 0], sizes = [1, 128], strides = [1, 1]} : vector<3x128xf32> to vector<1x128xf32>
    %78 = vector.extract_strided_slice %4 {offsets = [0, 0], sizes = [1, 128], strides = [1, 1]} : vector<9x128xf32> to vector<1x128xf32>
    %79 = arith.mulf %78, %75 : vector<1x128xf32>
    %80 = vector.extract_strided_slice %4 {offsets = [1, 0], sizes = [1, 128], strides = [1, 1]} : vector<9x128xf32> to vector<1x128xf32>
    %81 = arith.mulf %80, %76 : vector<1x128xf32>
    %82 = arith.addf %79, %81 : vector<1x128xf32>
    %83 = vector.extract_strided_slice %4 {offsets = [2, 0], sizes = [1, 128], strides = [1, 1]} : vector<9x128xf32> to vector<1x128xf32>
    %84 = arith.mulf %83, %77 : vector<1x128xf32>
    %85 = arith.addf %82, %84 : vector<1x128xf32>
    %c0_34 = arith.constant 0 : index
    %c0_35 = arith.constant 0 : index
    %86 = vector.load %arg9[%c0_34, %c0_35] : memref<3x128xf32, #tpu.memory_space<vmem>>, vector<1x128xf32>
    tpu.vector_store %arg9[%c0_34, %c0_35], %85 {strides = array<i32>} : memref<3x128xf32, #tpu.memory_space<vmem>>, vector<1x128xf32>,
    %87 = vector.extract_strided_slice %4 {offsets = [3, 0], sizes = [1, 128], strides = [1, 1]} : vector<9x128xf32> to vector<1x128xf32>
    %88 = arith.mulf %87, %75 : vector<1x128xf32>
    %89 = vector.extract_strided_slice %4 {offsets = [4, 0], sizes = [1, 128], strides = [1, 1]} : vector<9x128xf32> to vector<1x128xf32>
    %90 = arith.mulf %89, %76 : vector<1x128xf32>
    %91 = arith.addf %88, %90 : vector<1x128xf32>
    %92 = vector.extract_strided_slice %4 {offsets = [5, 0], sizes = [1, 128], strides = [1, 1]} : vector<9x128xf32> to vector<1x128xf32>
    %93 = arith.mulf %92, %77 : vector<1x128xf32>
    %94 = arith.addf %91, %93 : vector<1x128xf32>
    %c1 = arith.constant 1 : index
    %c0_36 = arith.constant 0 : index
    %95 = vector.load %arg9[%c1, %c0_36] : memref<3x128xf32, #tpu.memory_space<vmem>>, vector<1x128xf32>
    tpu.vector_store %arg9[%c1, %c0_36], %94 {strides = array<i32>} : memref<3x128xf32, #tpu.memory_space<vmem>>, vector<1x128xf32>,
    %96 = vector.extract_strided_slice %4 {offsets = [6, 0], sizes = [1, 128], strides = [1, 1]} : vector<9x128xf32> to vector<1x128xf32>
    %97 = arith.mulf %96, %75 : vector<1x128xf32>
    %98 = vector.extract_strided_slice %4 {offsets = [7, 0], sizes = [1, 128], strides = [1, 1]} : vector<9x128xf32> to vector<1x128xf32>
    %99 = arith.mulf %98, %76 : vector<1x128xf32>
    %100 = arith.addf %97, %99 : vector<1x128xf32>
    %101 = vector.extract_strided_slice %4 {offsets = [8, 0], sizes = [1, 128], strides = [1, 1]} : vector<9x128xf32> to vector<1x128xf32>
    %102 = arith.mulf %101, %77 : vector<1x128xf32>
    %103 = arith.addf %100, %102 : vector<1x128xf32>
    %c2 = arith.constant 2 : index
    %c0_37 = arith.constant 0 : index
    %104 = vector.load %arg9[%c2, %c0_37] : memref<3x128xf32, #tpu.memory_space<vmem>>, vector<1x128xf32>
    tpu.vector_store %arg9[%c2, %c0_37], %103 {strides = array<i32>} : memref<3x128xf32, #tpu.memory_space<vmem>>, vector<1x128xf32>,
    return
  }
  func.func @transform_0(%arg0: i32) -> (i32, i32) {
    %c0_i32 = arith.constant 0 : i32
    %c0_i32_0 = arith.constant 0 : i32
    return %c0_i32, %arg0 : i32, i32
  }
  func.func @transform_1(%arg0: i32) -> (i32, i32) {
    %c0_i32 = arith.constant 0 : i32
    %c0_i32_0 = arith.constant 0 : i32
    %c0_i32_1 = arith.constant 0 : i32
    return %c0_i32, %c0_i32_0 : i32, i32
  }
  func.func @transform_2(%arg0: i32) -> (i32, i32) {
    %c0_i32 = arith.constant 0 : i32
    %c0_i32_0 = arith.constant 0 : i32
    %c0_i32_1 = arith.constant 0 : i32
    return %c0_i32, %c0_i32_0 : i32, i32
  }
  func.func @transform_3(%arg0: i32) -> (i32, i32) {
    %c0_i32 = arith.constant 0 : i32
    %c0_i32_0 = arith.constant 0 : i32
    %c0_i32_1 = arith.constant 0 : i32
    return %c0_i32, %c0_i32_0 : i32, i32
  }
  func.func @transform_4(%arg0: i32) -> (i32, i32) {
    %c0_i32 = arith.constant 0 : i32
    %c0_i32_0 = arith.constant 0 : i32
    %c0_i32_1 = arith.constant 0 : i32
    return %c0_i32, %c0_i32_0 : i32, i32
  }
  func.func @transform_5(%arg0: i32) -> (i32, i32) {
    %c0_i32 = arith.constant 0 : i32
    %c0_i32_0 = arith.constant 0 : i32
    %c0_i32_1 = arith.constant 0 : i32
    return %c0_i32, %c0_i32_0 : i32, i32
  }
  func.func @transform_6(%arg0: i32) -> (i32, i32) {
    %c0_i32 = arith.constant 0 : i32
    %c0_i32_0 = arith.constant 0 : i32
    %c0_i32_1 = arith.constant 0 : i32
    return %c0_i32, %c0_i32_0 : i32, i32
  }
  func.func @transform_7(%arg0: i32) -> (i32, i32) {
    %c0_i32 = arith.constant 0 : i32
    %c0_i32_0 = arith.constant 0 : i32
    %c0_i32_1 = arith.constant 0 : i32
    return %c0_i32, %c0_i32_0 : i32, i32
  }
  func.func @transform_8(%arg0: i32) -> (i32, i32) {
    %c0_i32 = arith.constant 0 : i32
    %c0_i32_0 = arith.constant 0 : i32
    return %c0_i32, %arg0 : i32, i32
  }
}

</mosaic_0001>

<llo_original>
// kernel: tpu_custom_call.1
$region0: #{tpu_custom_call.1}
  #allocation0 [shape = 'u32[]', space=smem, size = 0x4, offset = 0x4, fixed_abs, tag = 'smem constant byte address 0x4 - core index']
  #allocation1 [shape = 'u32[144,128]{1,0:T(1,128)}', space=vmem, size = 0x12000, scoped, tag = 'internal scratch']
  %s0 = inlined_call_operand.vmem [shape: f32[16,128], index: 0, kind: input, shape index: {}]
  %s1 = inlined_call_operand.vmem [shape: f32[16,1], index: 1, kind: input, shape index: {}]
  %s2 = inlined_call_operand.vmem [shape: bf16[128,32], index: 2, kind: input, shape index: {}]
  %s3 = inlined_call_operand.vmem [shape: bf16[64,38], index: 3, kind: input, shape index: {}]
  %s4 = inlined_call_operand.vmem [shape: bf16[3,32], index: 4, kind: input, shape index: {}]
  %s5 = inlined_call_operand.vmem [shape: f32[128,1], index: 5, kind: input, shape index: {}]
  %s6 = inlined_call_operand.vmem [shape: f32[64,1], index: 6, kind: input, shape index: {}]
  %s7 = inlined_call_operand.vmem [shape: f32[3,1], index: 7, kind: input, shape index: {}]
  %s8 = inlined_call_operand.hbm [shape: f32[3,128], index: 8, kind: output, shape index: {}]
  %s9 = sld [smem:[#allocation0]]
  $region42: #{tpu_custom_call.1} parent=0
    _
  %s11 = ssub.s32 1, %s9
  %s12 = scalar_select 0, %s11, %s9
  $region1: #{tpu_custom_call.1} parent=0
    #allocation2 [shape = 'u8[2048]{0}', space=vmem, size = 0x800, scoped, tag = 'output window, operand 0, single buffered']
    #allocation3 [shape = 's32[1]{0}', space=sflag, size = 0x4, scoped, tag = 'scoped memory for tpu_custom_call.1']
    %13 = vsyncpa [#allocation3], 0
    // Predicated region
    $region2: #{tpu_custom_call.1} parent=1 // pred_check
      _
    $region3: #{tpu_custom_call.1} parent=1 // pred_check_branch
      %15 = sbr.rel (0) target = $region5
    $region4: #{tpu_custom_call.1} parent=1 // pred_region
      _
    $region5: #{tpu_custom_call.1} parent=1 // pred_fallthru
      _
    // Predicated region
    $region6: #{tpu_custom_call.1} parent=1 // pred_check
      _
    $region7: #{tpu_custom_call.1} parent=1 // pred_check_branch
      %17 = sbr.rel (0) target = $region9
    $region8: #{tpu_custom_call.1} parent=1 // pred_region
      _
    $region9: #{tpu_custom_call.1} parent=1 // pred_fallthru
      _
    // Predicated region
    $region10: #{tpu_custom_call.1} parent=1 // pred_check
      _
    $region11: #{tpu_custom_call.1} parent=1 // pred_check_branch
      %19 = sbr.rel (0) target = $region13
    $region12: #{tpu_custom_call.1} parent=1 // pred_region
      _
    $region13: #{tpu_custom_call.1} parent=1 // pred_fallthru
      _
    // Predicated region
    $region14: #{tpu_custom_call.1} parent=1 // pred_check
      _
    $region15: #{tpu_custom_call.1} parent=1 // pred_check_branch
      %21 = sbr.rel (0) target = $region17
    $region16: #{tpu_custom_call.1} parent=1 // pred_region
      _
    $region17: #{tpu_custom_call.1} parent=1 // pred_fallthru
      _
    // Predicated region
    $region18: #{tpu_custom_call.1} parent=1 // pred_check
      _
    $region19: #{tpu_custom_call.1} parent=1 // pred_check_branch
      %23 = sbr.rel (0) target = $region21
    $region20: #{tpu_custom_call.1} parent=1 // pred_region
      _
    $region21: #{tpu_custom_call.1} parent=1 // pred_fallthru
      _
    // Predicated region
    $region22: #{tpu_custom_call.1} parent=1 // pred_check
      _
    $region23: #{tpu_custom_call.1} parent=1 // pred_check_branch
      %25 = sbr.rel (0) target = $region25
    $region24: #{tpu_custom_call.1} parent=1 // pred_region
      _
    $region25: #{tpu_custom_call.1} parent=1 // pred_fallthru
      _
    // Predicated region
    $region26: #{tpu_custom_call.1} parent=1 // pred_check
      _
    $region27: #{tpu_custom_call.1} parent=1 // pred_check_branch
      %27 = sbr.rel (0) target = $region29
    $region28: #{tpu_custom_call.1} parent=1 // pred_region
      _
    $region29: #{tpu_custom_call.1} parent=1 // pred_fallthru
      _
    // Predicated region
    $region30: #{tpu_custom_call.1} parent=1 // pred_check
      _
    $region31: #{tpu_custom_call.1} parent=1 // pred_check_branch
      %29 = sbr.rel (0) target = $region33
    $region32: #{tpu_custom_call.1} parent=1 // pred_region
      _
    $region33: #{tpu_custom_call.1} parent=1 // pred_fallthru
      _
    %v31 = vld [vmem:[%s0] sm:$0xff]
    %v32 = vld [vmem:[%s0 + $0x8] sm:$0xff]
    %v33 = vld [vmem:[%s1] sm:$0xff]
    %v34 = vld [vmem:[%s1 + $0x8] sm:$0xff]
    %36 = vset.pattern.permute.xlu0 0
    %37 = vperm.xlu0 %36, %v33
    %v38 = vpop.permute.xlu0 %37
    %41 = vset.pattern.permute.xlu0 0
    %42 = vperm.xlu0 %41, %v34
    %v43 = vpop.permute.xlu0 %42
    %v45 = vlaneseq
    %v46 = vshrl.u32 %v45, 7
    %v47 = vsub.s32 6, %v46
    %v48 = vrot.slane %v31, %v47
    %v49 = vmul.f32 %v38, %v48
    %v50 = vmul.f32 %v43, %v48
    %v51 = vmul.f32 %v49, 6.2831855
    %v52 = vmul.f32 %v50, 6.2831855
    %v53 = vand.u32 2147483647, %v51
    %vm54 = vcmp.le.f32.partialorder %v53, 0.7853982
    %vm55 = vcmp.lt.s32.totalorder %v51, 0
    %v56 = vand.u32 %v51, 2139095040
    %v57 = vshrl.u32 %v56, 23
    %v58 = vsub.s32 %v57, 127
    %v59 = vand.u32 2147483647, %v51
    %v60 = vand.u32 %v59, 8388607
    %v61 = vor.u32 %v60, 8388608
    %v62 = vsub.s32 0, %v61
    %v63 = vadd.s32 %v58, 1
    %vm64 = vcmp.gt.s32.totalorder %v63, 0
    %v65 = vsel %vm64, %v63, 0
    %v66 = vshrl.u32 %v65, 5
    %v67 = vand.u32 %v65, 31
    %v68 = vsub.s32 32, %v67
    %v69 = vshrl.u32 683565275, %v68
    %v70 = vshll.u32 683565275, %v67
    %v71 = vshrl.u32 2475754826, %v68
    %v72 = vor.u32 %v70, %v71
    %v73 = vshll.u32 2475754826, %v67
    %v74 = vshrl.u32 2131351028, %v68
    %v75 = vor.u32 %v73, %v74
    %v76 = vshll.u32 2131351028, %v67
    %v77 = vshrl.u32 2102212464, %v68
    %v78 = vor.u32 %v76, %v77
    %v79 = vshll.u32 2102212464, %v67
    %v80 = vshrl.u32 920167782, %v68
    %v81 = vor.u32 %v79, %v80
    %v82 = vshll.u32 920167782, %v67
    %v83 = vshrl.u32 1326507024, %v68
    %v84 = vor.u32 %v82, %v83
    %vm85 = vcmp.lt.s32.totalorder %v66, 1
    %vm86 = vcmp.lt.s32.totalorder %v66, 2
    %vm87 = vcmp.lt.s32.totalorder %v66, 3
    %vm88 = vcmp.lt.s32.totalorder %v66, 4
    %v89 = vsel %vm85, %v69, %v72
    %v90 = vsel %vm88, %v78, 2102212464
    %v91 = vsel %vm87, %v75, %v90
    %v92 = vsel %vm86, %v89, %v91
    %v93 = vsel %vm85, %v72, %v75
    %v94 = vsel %vm88, %v81, 920167782
    %v95 = vsel %vm87, %v78, %v94
    %v96 = vsel %vm86, %v93, %v95
    %v97 = vsel %vm85, %v75, %v78
    %v98 = vsel %vm88, %v84, 1326507024
    %v99 = vsel %vm87, %v81, %v98
    %v100 = vsel %vm86, %v97, %v99
    %v101 = vshll.u32 %v61, 8
    %v102 = vmul.u32.u64.compose %v101, %v100
    %v103 = vextract.low.u32 %v102
    %v104 = vextract.high.u32 %v102
    %v105 = vmul.u32.u64.compose %v101, %v96
    %v106 = vextract.low.u32 %v105
    %v107 = vextract.high.u32 %v105
    %v108 = vmul.u32 %v101, %v92
    %v109 = vadd.s32 %v104, %v106
    %vm110 = vc.u32 %v104, %v106
    %v111 = vadd.s32 %v107, 1
    %v112 = vsel %vm110, %v111, %v107
    %v113 = vadd.s32 %v108, %v112
    %v114 = vadd.s32 %v113, 536870912
    %v115 = vshrl.u32 %v114, 30
    %v116 = vshll.u32 %v115, 30
    %v117 = vsub.s32 %v113, %v116
    %vm118 = vcmp.lt.s32.totalorder %v117, 0
    %v119 = vsub.s32 0, %v117
    %v120 = vsel %vm118, %v119, %v117
    %v121 = vclz %v120
    %v122 = vsub.s32 %v121, 2
    %vm123 = vcmp.gt.s32.totalorder 0, %v122
    %v124 = vsel %vm123, 0, %v122
    %v125 = vsub.s32 32, %v124
    %v126 = vshll.u32 %v117, %v124
    %v127 = vshrl.u32 %v109, %v125
    %v128 = vor.u32 %v126, %v127
    %v129 = vsub.s32 4294967266, %v124
    %v130 = vadd.s32 %v129, 127
    %v131 = vshll.u32 %v130, 23
    %v132 = vor.u32 4788187, %v131
    %v133 = vand.u32 2147483647, %v132
    %v135 = vcvt.s32.f32 %v128
    %v136 = vmul.f32 %v135, %v133
    %v137 = vxor.u32 %v136, 2147483648
    %v138 = vsel %vm55, %v137, %v136
    %v139 = vsub.s32 4, %v115
    %v140 = vsel %vm55, %v139, %v115
    %v141 = vsel %vm54, %v51, %v138
    %v142 = vsel %vm54, 0, %v140
    %v143 = vcosq.f32.pop %v141
    %v144 = vsinq.f32.pop %v141
    %vm145 = vweird.f32 %v51
    %v146 = vadd.s32 %v142, 3
    %v147 = vand.u32 %v146, 3
    %vm148 = vcmp.lt.s32.totalorder %v147, 2
    %vm149 = vcmp.eq.s32.totalorder %v147, 0
    %v150 = vxor.u32 %v144, 2147483648
    %v151 = vsel %vm149, %v143, %v150
    %vm152 = vcmp.eq.s32.totalorder %v147, 2
    %v153 = vxor.u32 %v143, 2147483648
    %v154 = vsel %vm152, %v153, %v144
    %v155 = vsel %vm148, %v151, %v154
    %v156 = vsel %vm145, nan, %v155
    %v157 = vand.u32 2147483647, %v52
    %vm158 = vcmp.le.f32.partialorder %v157, 0.7853982
    %vm159 = vcmp.lt.s32.totalorder %v52, 0
    %v160 = vand.u32 %v52, 2139095040
    %v161 = vshrl.u32 %v160, 23
    %v162 = vsub.s32 %v161, 127
    %v163 = vand.u32 2147483647, %v52
    %v164 = vand.u32 %v163, 8388607
    %v165 = vor.u32 %v164, 8388608
    %v166 = vsub.s32 0, %v165
    %v167 = vadd.s32 %v162, 1
    %vm168 = vcmp.gt.s32.totalorder %v167, 0
    %v169 = vsel %vm168, %v167, 0
    %v170 = vshrl.u32 %v169, 5
    %v171 = vand.u32 %v169, 31
    %v172 = vsub.s32 32, %v171
    %v173 = vshrl.u32 683565275, %v172
    %v174 = vshll.u32 683565275, %v171
    %v175 = vshrl.u32 2475754826, %v172
    %v176 = vor.u32 %v174, %v175
    %v177 = vshll.u32 2475754826, %v171
    %v178 = vshrl.u32 2131351028, %v172
    %v179 = vor.u32 %v177, %v178
    %v180 = vshll.u32 2131351028, %v171
    %v181 = vshrl.u32 2102212464, %v172
    %v182 = vor.u32 %v180, %v181
    %v183 = vshll.u32 2102212464, %v171
    %v184 = vshrl.u32 920167782, %v172
    %v185 = vor.u32 %v183, %v184
    %v186 = vshll.u32 920167782, %v171
    %v187 = vshrl.u32 1326507024, %v172
    %v188 = vor.u32 %v186, %v187
    %vm189 = vcmp.lt.s32.totalorder %v170, 1
    %vm190 = vcmp.lt.s32.totalorder %v170, 2
    %vm191 = vcmp.lt.s32.totalorder %v170, 3
    %vm192 = vcmp.lt.s32.totalorder %v170, 4
    %v193 = vsel %vm189, %v173, %v176
    %v194 = vsel %vm192, %v182, 2102212464
    %v195 = vsel %vm191, %v179, %v194
    %v196 = vsel %vm190, %v193, %v195
    %v197 = vsel %vm189, %v176, %v179
    %v198 = vsel %vm192, %v185, 920167782
    %v199 = vsel %vm191, %v182, %v198
    %v200 = vsel %vm190, %v197, %v199
    %v201 = vsel %vm189, %v179, %v182
    %v202 = vsel %vm192, %v188, 1326507024
    %v203 = vsel %vm191, %v185, %v202
    %v204 = vsel %vm190, %v201, %v203
    %v205 = vshll.u32 %v165, 8
    %v206 = vmul.u32.u64.compose %v205, %v204
    %v207 = vextract.low.u32 %v206
    %v208 = vextract.high.u32 %v206
    %v209 = vmul.u32.u64.compose %v205, %v200
    %v210 = vextract.low.u32 %v209
    %v211 = vextract.high.u32 %v209
    %v212 = vmul.u32 %v205, %v196
    %v213 = vadd.s32 %v208, %v210
    %vm214 = vc.u32 %v208, %v210
    %v215 = vadd.s32 %v211, 1
    %v216 = vsel %vm214, %v215, %v211
    %v217 = vadd.s32 %v212, %v216
    %v218 = vadd.s32 %v217, 536870912
    %v219 = vshrl.u32 %v218, 30
    %v220 = vshll.u32 %v219, 30
    %v221 = vsub.s32 %v217, %v220
    %vm222 = vcmp.lt.s32.totalorder %v221, 0
    %v223 = vsub.s32 0, %v221
    %v224 = vsel %vm222, %v223, %v221
    %v225 = vclz %v224
    %v226 = vsub.s32 %v225, 2
    %vm227 = vcmp.gt.s32.totalorder 0, %v226
    %v228 = vsel %vm227, 0, %v226
    %v229 = vsub.s32 32, %v228
    %v230 = vshll.u32 %v221, %v228
    %v231 = vshrl.u32 %v213, %v229
    %v232 = vor.u32 %v230, %v231
    %v233 = vsub.s32 4294967266, %v228
    %v234 = vadd.s32 %v233, 127
    %v235 = vshll.u32 %v234, 23
    %v236 = vor.u32 4788187, %v235
    %v237 = vand.u32 2147483647, %v236
    %v239 = vcvt.s32.f32 %v232
    %v240 = vmul.f32 %v239, %v237
    %v241 = vxor.u32 %v240, 2147483648
    %v242 = vsel %vm159, %v241, %v240
    %v243 = vsub.s32 4, %v219
    %v244 = vsel %vm159, %v243, %v219
    %v245 = vsel %vm158, %v52, %v242
    %v246 = vsel %vm158, 0, %v244
    %v247 = vcosq.f32.pop %v245
    %v248 = vsinq.f32.pop %v245
    %vm249 = vweird.f32 %v52
    %v250 = vadd.s32 %v246, 3
    %v251 = vand.u32 %v250, 3
    %vm252 = vcmp.lt.s32.totalorder %v251, 2
    %vm253 = vcmp.eq.s32.totalorder %v251, 0
    %v254 = vxor.u32 %v248, 2147483648
    %v255 = vsel %vm253, %v247, %v254
    %vm256 = vcmp.eq.s32.totalorder %v251, 2
    %v257 = vxor.u32 %v247, 2147483648
    %v258 = vsel %vm256, %v257, %v248
    %v259 = vsel %vm252, %v255, %v258
    %v260 = vsel %vm249, nan, %v259
    %v261 = vand.u32 2147483647, %v51
    %vm262 = vcmp.le.f32.partialorder %v261, 0.7853982
    %vm263 = vcmp.lt.s32.totalorder %v51, 0
    %v264 = vand.u32 %v51, 2139095040
    %v265 = vshrl.u32 %v264, 23
    %v266 = vsub.s32 %v265, 127
    %v267 = vand.u32 2147483647, %v51
    %v268 = vand.u32 %v267, 8388607
    %v269 = vor.u32 %v268, 8388608
    %v270 = vsub.s32 0, %v269
    %v271 = vadd.s32 %v266, 1
    %vm272 = vcmp.gt.s32.totalorder %v271, 0
    %v273 = vsel %vm272, %v271, 0
    %v274 = vshrl.u32 %v273, 5
    %v275 = vand.u32 %v273, 31
    %v276 = vsub.s32 32, %v275
    %v277 = vshrl.u32 683565275, %v276
    %v278 = vshll.u32 683565275, %v275
    %v279 = vshrl.u32 2475754826, %v276
    %v280 = vor.u32 %v278, %v279
    %v281 = vshll.u32 2475754826, %v275
    %v282 = vshrl.u32 2131351028, %v276
    %v283 = vor.u32 %v281, %v282
    %v284 = vshll.u32 2131351028, %v275
    %v285 = vshrl.u32 2102212464, %v276
    %v286 = vor.u32 %v284, %v285
    %v287 = vshll.u32 2102212464, %v275
    %v288 = vshrl.u32 920167782, %v276
    %v289 = vor.u32 %v287, %v288
    %v290 = vshll.u32 920167782, %v275
    %v291 = vshrl.u32 1326507024, %v276
    %v292 = vor.u32 %v290, %v291
    %vm293 = vcmp.lt.s32.totalorder %v274, 1
    %vm294 = vcmp.lt.s32.totalorder %v274, 2
    %vm295 = vcmp.lt.s32.totalorder %v274, 3
    %vm296 = vcmp.lt.s32.totalorder %v274, 4
    %v297 = vsel %vm293, %v277, %v280
    %v298 = vsel %vm296, %v286, 2102212464
    %v299 = vsel %vm295, %v283, %v298
    %v300 = vsel %vm294, %v297, %v299
    %v301 = vsel %vm293, %v280, %v283
    %v302 = vsel %vm296, %v289, 920167782
    %v303 = vsel %vm295, %v286, %v302
    %v304 = vsel %vm294, %v301, %v303
    %v305 = vsel %vm293, %v283, %v286
    %v306 = vsel %vm296, %v292, 1326507024
    %v307 = vsel %vm295, %v289, %v306
    %v308 = vsel %vm294, %v305, %v307
    %v309 = vshll.u32 %v269, 8
    %v310 = vmul.u32.u64.compose %v309, %v308
    %v311 = vextract.low.u32 %v310
    %v312 = vextract.high.u32 %v310
    %v313 = vmul.u32.u64.compose %v309, %v304
    %v314 = vextract.low.u32 %v313
    %v315 = vextract.high.u32 %v313
    %v316 = vmul.u32 %v309, %v300
    %v317 = vadd.s32 %v312, %v314
    %vm318 = vc.u32 %v312, %v314
    %v319 = vadd.s32 %v315, 1
    %v320 = vsel %vm318, %v319, %v315
    %v321 = vadd.s32 %v316, %v320
    %v322 = vadd.s32 %v321, 536870912
    %v323 = vshrl.u32 %v322, 30
    %v324 = vshll.u32 %v323, 30
    %v325 = vsub.s32 %v321, %v324
    %vm326 = vcmp.lt.s32.totalorder %v325, 0
    %v327 = vsub.s32 0, %v325
    %v328 = vsel %vm326, %v327, %v325
    %v329 = vclz %v328
    %v330 = vsub.s32 %v329, 2
    %vm331 = vcmp.gt.s32.totalorder 0, %v330
    %v332 = vsel %vm331, 0, %v330
    %v333 = vsub.s32 32, %v332
    %v334 = vshll.u32 %v325, %v332
    %v335 = vshrl.u32 %v317, %v333
    %v336 = vor.u32 %v334, %v335
    %v337 = vsub.s32 4294967266, %v332
    %v338 = vadd.s32 %v337, 127
    %v339 = vshll.u32 %v338, 23
    %v340 = vor.u32 4788187, %v339
    %v341 = vand.u32 2147483647, %v340
    %v343 = vcvt.s32.f32 %v336
    %v344 = vmul.f32 %v343, %v341
    %v345 = vxor.u32 %v344, 2147483648
    %v346 = vsel %vm263, %v345, %v344
    %v347 = vsub.s32 4, %v323
    %v348 = vsel %vm263, %v347, %v323
    %v349 = vsel %vm262, %v51, %v346
    %v350 = vsel %vm262, 0, %v348
    %v351 = vcosq.f32.pop %v349
    %v352 = vsinq.f32.pop %v349
    %vm353 = vweird.f32 %v51
    %v354 = vand.u32 %v350, 3
    %vm355 = vcmp.lt.s32.totalorder %v354, 2
    %vm356 = vcmp.eq.s32.totalorder %v354, 0
    %v357 = vxor.u32 %v352, 2147483648
    %v358 = vsel %vm356, %v351, %v357
    %vm359 = vcmp.eq.s32.totalorder %v354, 2
    %v360 = vxor.u32 %v351, 2147483648
    %v361 = vsel %vm359, %v360, %v352
    %v362 = vsel %vm355, %v358, %v361
    %v363 = vsel %vm353, nan, %v362
    %v364 = vand.u32 2147483647, %v52
    %vm365 = vcmp.le.f32.partialorder %v364, 0.7853982
    %vm366 = vcmp.lt.s32.totalorder %v52, 0
    %v367 = vand.u32 %v52, 2139095040
    %v368 = vshrl.u32 %v367, 23
    %v369 = vsub.s32 %v368, 127
    %v370 = vand.u32 2147483647, %v52
    %v371 = vand.u32 %v370, 8388607
    %v372 = vor.u32 %v371, 8388608
    %v373 = vsub.s32 0, %v372
    %v374 = vadd.s32 %v369, 1
    %vm375 = vcmp.gt.s32.totalorder %v374, 0
    %v376 = vsel %vm375, %v374, 0
    %v377 = vshrl.u32 %v376, 5
    %v378 = vand.u32 %v376, 31
    %v379 = vsub.s32 32, %v378
    %v380 = vshrl.u32 683565275, %v379
    %v381 = vshll.u32 683565275, %v378
    %v382 = vshrl.u32 2475754826, %v379
    %v383 = vor.u32 %v381, %v382
    %v384 = vshll.u32 2475754826, %v378
    %v385 = vshrl.u32 2131351028, %v379
    %v386 = vor.u32 %v384, %v385
    %v387 = vshll.u32 2131351028, %v378
    %v388 = vshrl.u32 2102212464, %v379
    %v389 = vor.u32 %v387, %v388
    %v390 = vshll.u32 2102212464, %v378
    %v391 = vshrl.u32 920167782, %v379
    %v392 = vor.u32 %v390, %v391
    %v393 = vshll.u32 920167782, %v378
    %v394 = vshrl.u32 1326507024, %v379
    %v395 = vor.u32 %v393, %v394
    %vm396 = vcmp.lt.s32.totalorder %v377, 1
    %vm397 = vcmp.lt.s32.totalorder %v377, 2
    %vm398 = vcmp.lt.s32.totalorder %v377, 3
    %vm399 = vcmp.lt.s32.totalorder %v377, 4
    %v400 = vsel %vm396, %v380, %v383
    %v401 = vsel %vm399, %v389, 2102212464
    %v402 = vsel %vm398, %v386, %v401
    %v403 = vsel %vm397, %v400, %v402
    %v404 = vsel %vm396, %v383, %v386
    %v405 = vsel %vm399, %v392, 920167782
    %v406 = vsel %vm398, %v389, %v405
    %v407 = vsel %vm397, %v404, %v406
    %v408 = vsel %vm396, %v386, %v389
    %v409 = vsel %vm399, %v395, 1326507024
    %v410 = vsel %vm398, %v392, %v409
    %v411 = vsel %vm397, %v408, %v410
    %v412 = vshll.u32 %v372, 8
    %v413 = vmul.u32.u64.compose %v412, %v411
    %v414 = vextract.low.u32 %v413
    %v415 = vextract.high.u32 %v413
    %v416 = vmul.u32.u64.compose %v412, %v407
    %v417 = vextract.low.u32 %v416
    %v418 = vextract.high.u32 %v416
    %v419 = vmul.u32 %v412, %v403
    %v420 = vadd.s32 %v415, %v417
    %vm421 = vc.u32 %v415, %v417
    %v422 = vadd.s32 %v418, 1
    %v423 = vsel %vm421, %v422, %v418
    %v424 = vadd.s32 %v419, %v423
    %v425 = vadd.s32 %v424, 536870912
    %v426 = vshrl.u32 %v425, 30
    %v427 = vshll.u32 %v426, 30
    %v428 = vsub.s32 %v424, %v427
    %vm429 = vcmp.lt.s32.totalorder %v428, 0
    %v430 = vsub.s32 0, %v428
    %v431 = vsel %vm429, %v430, %v428
    %v432 = vclz %v431
    %v433 = vsub.s32 %v432, 2
    %vm434 = vcmp.gt.s32.totalorder 0, %v433
    %v435 = vsel %vm434, 0, %v433
    %v436 = vsub.s32 32, %v435
    %v437 = vshll.u32 %v428, %v435
    %v438 = vshrl.u32 %v420, %v436
    %v439 = vor.u32 %v437, %v438
    %v440 = vsub.s32 4294967266, %v435
    %v441 = vadd.s32 %v440, 127
    %v442 = vshll.u32 %v441, 23
    %v443 = vor.u32 4788187, %v442
    %v444 = vand.u32 2147483647, %v443
    %v446 = vcvt.s32.f32 %v439
    %v447 = vmul.f32 %v446, %v444
    %v448 = vxor.u32 %v447, 2147483648
    %v449 = vsel %vm366, %v448, %v447
    %v450 = vsub.s32 4, %v426
    %v451 = vsel %vm366, %v450, %v426
    %v452 = vsel %vm365, %v52, %v449
    %v453 = vsel %vm365, 0, %v451
    %v454 = vcosq.f32.pop %v452
    %v455 = vsinq.f32.pop %v452
    %vm456 = vweird.f32 %v52
    %v457 = vand.u32 %v453, 3
    %vm458 = vcmp.lt.s32.totalorder %v457, 2
    %vm459 = vcmp.eq.s32.totalorder %v457, 0
    %v460 = vxor.u32 %v455, 2147483648
    %v461 = vsel %vm459, %v454, %v460
    %vm462 = vcmp.eq.s32.totalorder %v457, 2
    %v463 = vxor.u32 %v454, 2147483648
    %v464 = vsel %vm462, %v463, %v455
    %v465 = vsel %vm458, %v461, %v464
    %v466 = vsel %vm456, nan, %v465
    %v467 = vld [vmem:[%s2] sm:$0xf]
    %v468 = vld [vmem:[%s2 + $0x4] sm:$0xf]
    %v469 = vld [vmem:[%s2 + $0x8] sm:$0xf]
    %v470 = vld [vmem:[%s2 + $0xc] sm:$0xf]
    %v471 = vpack.c.bf16 %v260, %v156
    %v472 = vpack.c.bf16 %v466, %v363
    %v473 = vld [vmem:[%s5] sm:$0xff]
    %v474 = vld [vmem:[%s5 + $0x8] sm:$0xff]
    %v475 = vld [vmem:[%s5 + $0x10] sm:$0xff]
    %v476 = vld [vmem:[%s5 + $0x18] sm:$0xff]
    %478 = vset.pattern.permute.xlu0 0
    %479 = vperm.xlu0 %478, %v473
    %v480 = vpop.permute.xlu0 %479
    %483 = vset.pattern.permute.xlu0 0
    %484 = vperm.xlu0 %483, %v474
    %v485 = vpop.permute.xlu0 %484
    %488 = vset.pattern.permute.xlu0 0
    %489 = vperm.xlu0 %488, %v475
    %v490 = vpop.permute.xlu0 %489
    %493 = vset.pattern.permute.xlu0 0
    %494 = vperm.xlu0 %493, %v476
    %v495 = vpop.permute.xlu0 %494
    %v501 = vunpack.c.l.b16 %v467
    %v502 = vunpack.c.l.b16 %v468
    %v503 = vunpack.c.l.b16 %v469
    %v504 = vunpack.c.l.b16 %v470
    %v505 = vpack.c.b16 %v502, %v501
    %v506 = vpack.c.b16 %v504, %v503
    %vm507 = vcmask 261120
    %v509 = vsel %vm507, %v505, 0
    %v512 = vsel %vm507, %v506, 0
    %514 = vmatprep.subr.bf16.mxu0 0
    %515 = vmatpush1.bf16.msra.mxu0 %v471
    %516 = vmatprep.subr.bf16.mxu0 0
    %517 = vmatpush1.bf16.msra.mxu0 %v472
    %518 = vmatprep.subr.bf16.mxu0 0
    %519 = vmatpush1.bf16.msra.mxu0 0
    %520 = vmatprep.subr.bf16.mxu0 0
    %521 = vmatpush1.bf16.msra.mxu0 0
    %522 = vmatprep.subr.bf16.mxu0 0
    %523 = vmatpush1.bf16.msra.mxu0 0
    %524 = vmatprep.subr.bf16.mxu0 0
    %525 = vmatpush1.bf16.msra.mxu0 0
    %526 = vmatprep.subr.bf16.mxu0 0
    %527 = vmatpush1.bf16.msra.mxu0 0
    %528 = vmatprep.subr.bf16.mxu0 0
    %529 = vmatpush1.bf16.msra.mxu0 0
    %530 = vmatprep.subr.bf16.mxu0 0
    %531 = vmatpush1.bf16.msra.mxu0 0
    %532 = vmatprep.subr.bf16.mxu0 0
    %533 = vmatpush1.bf16.msra.mxu0 0
    %534 = vmatprep.subr.bf16.mxu0 0
    %535 = vmatpush1.bf16.msra.mxu0 0
    %536 = vmatprep.subr.bf16.mxu0 0
    %537 = vmatpush1.bf16.msra.mxu0 0
    %538 = vmatprep.subr.bf16.mxu0 0
    %539 = vmatpush1.bf16.msra.mxu0 0
    %540 = vmatprep.subr.bf16.mxu0 0
    %541 = vmatpush1.bf16.msra.mxu0 0
    %542 = vmatprep.subr.bf16.mxu0 0
    %543 = vmatpush1.bf16.msra.mxu0 0
    %544 = vmatprep.subr.bf16.mxu0 0
    %545 = vmatpush1.bf16.msra.mxu0 0
    %546 = vmatprep.mubr.bf16.mxu0 0
    %547 = vmatmul.mubr.bf16.gmra.mrb[0].mxu0 %v509
    %v548 = vpop.f32.mrb[0].mxu0
    %v549 = vadd.f32 %v480, %v548
    %v550 = vpop.f32.mrb[0].mxu0
    %v551 = vpop.f32.mrb[0].mxu0
    %v552 = vadd.f32 %v485, %v551
    %v553 = vpop.f32.mrb[0].mxu0
    %554 = vmatprep.mubr.bf16.mxu0 0
    %555 = vmatmul.mubr.bf16.gmra.mrb[0].mxu0 %v512
    %v556 = vpop.f32.mrb[0].mxu0
    %v557 = vadd.f32 %v490, %v556
    %v558 = vpop.f32.mrb[0].mxu0
    %v559 = vpop.f32.mrb[0].mxu0
    %v560 = vadd.f32 %v495, %v559
    %v561 = vpop.f32.mrb[0].mxu0
    %562 = vdwg.mxu0
    %v563 = vxor.u32 %v549, 2147483648
    %v564 = vxor.u32 %v552, 2147483648
    %v565 = vxor.u32 %v557, 2147483648
    %v566 = vxor.u32 %v560, 2147483648
    %v567 = vmul.f32 %v563, 1.442695
    %v568 = vpow.pop %v567
    %v569 = vmul.f32 %v564, 1.442695
    %v570 = vpow.pop %v569
    %v571 = vmul.f32 %v565, 1.442695
    %v572 = vpow.pop %v571
    %v573 = vmul.f32 %v566, 1.442695
    %v574 = vpow.pop %v573
    %v575 = vadd.f32 %v568, 1.0
    %v576 = vadd.f32 %v570, 1.0
    %v577 = vadd.f32 %v572, 1.0
    %v578 = vadd.f32 %v574, 1.0
    %v579 = vrcp.pop %v575
    %v580 = vmul.f32 1.0, %v579
    %v581 = vrcp.pop %v576
    %v582 = vmul.f32 1.0, %v581
    %v583 = vrcp.pop %v577
    %v584 = vmul.f32 1.0, %v583
    %v585 = vrcp.pop %v578
    %v586 = vmul.f32 1.0, %v585
    %vm591 = vcmask 1045504
    %v592 = vrot.slane %v580, 2
    %v593 = vrot.slane %v582, 2
    %v594 = vsel %vm591, %v592, %v593
    %v595 = vrot.slane %v584, 2
    %v596 = vsel %vm591, %v593, %v595
    %v597 = vrot.slane %v586, 2
    %v598 = vsel %vm591, %v595, %v597
    %v604 = vsel %vm591, %v31, %v592
    %v605 = vpack.c.bf16 %v594, %v604
    %v606 = vpack.c.bf16 %v598, %v596
    %v607 = vpack.c.bf16 %v597, %v597
    %v608 = vld [vmem:[%s3] sm:$0xf]
    %v609 = vld [vmem:[%s3 + $0x4] sm:$0xf]
    %v610 = vld [vmem:[%s3 + $0x8] sm:$0xf]
    %v611 = vld [vmem:[%s3 + $0xc] sm:$0xf]
    %v612 = vld [vmem:[%s3 + $0x10] sm:$0xf]
    %v613 = vld [vmem:[%s3 + $0x14] sm:$0xf]
    %v614 = vld [vmem:[%s3 + $0x18] sm:$0xf]
    %v615 = vld [vmem:[%s3 + $0x1c] sm:$0xf]
    %v616 = vld [vmem:[%s6] sm:$0xff]
    %v617 = vld [vmem:[%s6 + $0x8] sm:$0xff]
    %v618 = vld [vmem:[%s6 + $0x10] sm:$0xff]
    %v619 = vld [vmem:[%s6 + $0x18] sm:$0xff]
    %v620 = vld [vmem:[%s6 + $0x20] sm:$0xff]
    %v621 = vld [vmem:[%s6 + $0x28] sm:$0xff]
    %v622 = vld [vmem:[%s6 + $0x30] sm:$0xff]
    %v623 = vld [vmem:[%s6 + $0x38] sm:$0xff]
    %625 = vset.pattern.permute.xlu0 0
    %626 = vperm.xlu0 %625, %v616
    %v627 = vpop.permute.xlu0 %626
    %630 = vset.pattern.permute.xlu0 0
    %631 = vperm.xlu0 %630, %v617
    %v632 = vpop.permute.xlu0 %631
    %635 = vset.pattern.permute.xlu0 0
    %636 = vperm.xlu0 %635, %v618
    %v637 = vpop.permute.xlu0 %636
    %640 = vset.pattern.permute.xlu0 0
    %641 = vperm.xlu0 %640, %v619
    %v642 = vpop.permute.xlu0 %641
    %645 = vset.pattern.permute.xlu0 0
    %646 = vperm.xlu0 %645, %v620
    %v647 = vpop.permute.xlu0 %646
    %650 = vset.pattern.permute.xlu0 0
    %651 = vperm.xlu0 %650, %v621
    %v652 = vpop.permute.xlu0 %651
    %655 = vset.pattern.permute.xlu0 0
    %656 = vperm.xlu0 %655, %v622
    %v657 = vpop.permute.xlu0 %656
    %660 = vset.pattern.permute.xlu0 0
    %661 = vperm.xlu0 %660, %v623
    %v662 = vpop.permute.xlu0 %661
    %v672 = vunpack.c.l.b16 %v608
    %v673 = vunpack.c.l.b16 %v609
    %v674 = vunpack.c.l.b16 %v610
    %v675 = vunpack.c.l.b16 %v611
    %v676 = vunpack.c.l.b16 %v612
    %v677 = vunpack.c.l.b16 %v613
    %v678 = vunpack.c.l.b16 %v614
    %v679 = vunpack.c.l.b16 %v615
    %v680 = vpack.c.b16 %v673, %v672
    %v681 = vpack.c.b16 %v675, %v674
    %v682 = vpack.c.b16 %v677, %v676
    %v683 = vpack.c.b16 %v679, %v678
    %vm684 = vcmask 310272
    %v686 = vsel %vm684, %v680, 0
    %v689 = vsel %vm684, %v681, 0
    %v692 = vsel %vm684, %v682, 0
    %v695 = vsel %vm684, %v683, 0
    %vm697 = vcmask 1042432
    %v699 = vsel %vm697, %v607, 0
    %701 = vmatprep.subr.bf16.mxu0 0
    %702 = vmatpush1.bf16.msra.mxu0 %v605
    %703 = vmatprep.subr.bf16.mxu0 0
    %704 = vmatpush1.bf16.msra.mxu0 %v606
    %705 = vmatprep.subr.bf16.mxu0 0
    %706 = vmatpush1.bf16.msra.mxu0 %v699
    %707 = vmatprep.subr.bf16.mxu0 0
    %708 = vmatpush1.bf16.msra.mxu0 0
    %709 = vmatprep.subr.bf16.mxu0 0
    %710 = vmatpush1.bf16.msra.mxu0 0
    %711 = vmatprep.subr.bf16.mxu0 0
    %712 = vmatpush1.bf16.msra.mxu0 0
    %713 = vmatprep.subr.bf16.mxu0 0
    %714 = vmatpush1.bf16.msra.mxu0 0
    %715 = vmatprep.subr.bf16.mxu0 0
    %716 = vmatpush1.bf16.msra.mxu0 0
    %717 = vmatprep.subr.bf16.mxu0 0
    %718 = vmatpush1.bf16.msra.mxu0 0
    %719 = vmatprep.subr.bf16.mxu0 0
    %720 = vmatpush1.bf16.msra.mxu0 0
    %721 = vmatprep.subr.bf16.mxu0 0
    %722 = vmatpush1.bf16.msra.mxu0 0
    %723 = vmatprep.subr.bf16.mxu0 0
    %724 = vmatpush1.bf16.msra.mxu0 0
    %725 = vmatprep.subr.bf16.mxu0 0
    %726 = vmatpush1.bf16.msra.mxu0 0
    %727 = vmatprep.subr.bf16.mxu0 0
    %728 = vmatpush1.bf16.msra.mxu0 0
    %729 = vmatprep.subr.bf16.mxu0 0
    %730 = vmatpush1.bf16.msra.mxu0 0
    %731 = vmatprep.subr.bf16.mxu0 0
    %732 = vmatpush1.bf16.msra.mxu0 0
    %733 = vmatprep.mubr.bf16.mxu0 0
    %734 = vmatmul.mubr.bf16.gmra.mrb[0].mxu0 %v686
    %v735 = vpop.f32.mrb[0].mxu0
    %v736 = vadd.f32 %v627, %v735
    %v737 = vpop.f32.mrb[0].mxu0
    %v738 = vpop.f32.mrb[0].mxu0
    %v739 = vadd.f32 %v632, %v738
    %v740 = vpop.f32.mrb[0].mxu0
    %741 = vmatprep.mubr.bf16.mxu0 0
    %742 = vmatmul.mubr.bf16.gmra.mrb[0].mxu0 %v689
    %v743 = vpop.f32.mrb[0].mxu0
    %v744 = vadd.f32 %v637, %v743
    %v745 = vpop.f32.mrb[0].mxu0
    %v746 = vpop.f32.mrb[0].mxu0
    %v747 = vadd.f32 %v642, %v746
    %v748 = vpop.f32.mrb[0].mxu0
    %749 = vmatprep.mubr.bf16.mxu0 0
    %750 = vmatmul.mubr.bf16.gmra.mrb[0].mxu0 %v692
    %v751 = vpop.f32.mrb[0].mxu0
    %v752 = vadd.f32 %v647, %v751
    %v753 = vpop.f32.mrb[0].mxu0
    %v754 = vpop.f32.mrb[0].mxu0
    %v755 = vadd.f32 %v652, %v754
    %v756 = vpop.f32.mrb[0].mxu0
    %757 = vmatprep.mubr.bf16.mxu0 0
    %758 = vmatmul.mubr.bf16.gmra.mrb[0].mxu0 %v695
    %v759 = vpop.f32.mrb[0].mxu0
    %v760 = vadd.f32 %v657, %v759
    %v761 = vpop.f32.mrb[0].mxu0
    %v762 = vpop.f32.mrb[0].mxu0
    %v763 = vadd.f32 %v662, %v762
    %v764 = vpop.f32.mrb[0].mxu0
    %765 = vdwg.mxu0
    %v766 = vld [vmem:[%s2 + $0x10] sm:$0xf]
    %v767 = vld [vmem:[%s2 + $0x14] sm:$0xf]
    %v768 = vld [vmem:[%s2 + $0x18] sm:$0xf]
    %v769 = vld [vmem:[%s2 + $0x1c] sm:$0xf]
    %v770 = vpack.c.bf16 %v739, %v736
    %v771 = vpack.c.bf16 %v747, %v744
    %v772 = vld [vmem:[%s5 + $0x20] sm:$0xff]
    %v773 = vld [vmem:[%s5 + $0x28] sm:$0xff]
    %v774 = vld [vmem:[%s5 + $0x30] sm:$0xff]
    %v775 = vld [vmem:[%s5 + $0x38] sm:$0xff]
    %777 = vset.pattern.permute.xlu0 0
    %778 = vperm.xlu0 %777, %v772
    %v779 = vpop.permute.xlu0 %778
    %782 = vset.pattern.permute.xlu0 0
    %783 = vperm.xlu0 %782, %v773
    %v784 = vpop.permute.xlu0 %783
    %787 = vset.pattern.permute.xlu0 0
    %788 = vperm.xlu0 %787, %v774
    %v789 = vpop.permute.xlu0 %788
    %792 = vset.pattern.permute.xlu0 0
    %793 = vperm.xlu0 %792, %v775
    %v794 = vpop.permute.xlu0 %793
    %v800 = vunpack.c.l.b16 %v766
    %v801 = vunpack.c.l.b16 %v767
    %v802 = vunpack.c.l.b16 %v768
    %v803 = vunpack.c.l.b16 %v769
    %v804 = vpack.c.b16 %v801, %v800
    %v805 = vpack.c.b16 %v803, %v802
    %v807 = vsel %vm507, %v804, 0
    %v810 = vsel %vm507, %v805, 0
    %812 = vmatprep.subr.bf16.mxu0 0
    %813 = vmatpush1.bf16.msra.mxu0 %v770
    %814 = vmatprep.subr.bf16.mxu0 0
    %815 = vmatpush1.bf16.msra.mxu0 %v771
    %816 = vmatprep.subr.bf16.mxu0 0
    %817 = vmatpush1.bf16.msra.mxu0 0
    %818 = vmatprep.subr.bf16.mxu0 0
    %819 = vmatpush1.bf16.msra.mxu0 0
    %820 = vmatprep.subr.bf16.mxu0 0
    %821 = vmatpush1.bf16.msra.mxu0 0
    %822 = vmatprep.subr.bf16.mxu0 0
    %823 = vmatpush1.bf16.msra.mxu0 0
    %824 = vmatprep.subr.bf16.mxu0 0
    %825 = vmatpush1.bf16.msra.mxu0 0
    %826 = vmatprep.subr.bf16.mxu0 0
    %827 = vmatpush1.bf16.msra.mxu0 0
    %828 = vmatprep.subr.bf16.mxu0 0
    %829 = vmatpush1.bf16.msra.mxu0 0
    %830 = vmatprep.subr.bf16.mxu0 0
    %831 = vmatpush1.bf16.msra.mxu0 0
    %832 = vmatprep.subr.bf16.mxu0 0
    %833 = vmatpush1.bf16.msra.mxu0 0
    %834 = vmatprep.subr.bf16.mxu0 0
    %835 = vmatpush1.bf16.msra.mxu0 0
    %836 = vmatprep.subr.bf16.mxu0 0
    %837 = vmatpush1.bf16.msra.mxu0 0
    %838 = vmatprep.subr.bf16.mxu0 0
    %839 = vmatpush1.bf16.msra.mxu0 0
    %840 = vmatprep.subr.bf16.mxu0 0
    %841 = vmatpush1.bf16.msra.mxu0 0
    %842 = vmatprep.subr.bf16.mxu0 0
    %843 = vmatpush1.bf16.msra.mxu0 0
    %844 = vmatprep.mubr.bf16.mxu0 0
    %845 = vmatmul.mubr.bf16.gmra.mrb[0].mxu0 %v807
    %v846 = vpop.f32.mrb[0].mxu0
    %v847 = vadd.f32 %v779, %v846
    %v848 = vpop.f32.mrb[0].mxu0
    %v849 = vpop.f32.mrb[0].mxu0
    %v850 = vadd.f32 %v784, %v849
    %v851 = vpop.f32.mrb[0].mxu0
    %852 = vmatprep.mubr.bf16.mxu0 0
    %853 = vmatmul.mubr.bf16.gmra.mrb[0].mxu0 %v810
    %v854 = vpop.f32.mrb[0].mxu0
    %v855 = vadd.f32 %v789, %v854
    %v856 = vpop.f32.mrb[0].mxu0
    %v857 = vpop.f32.mrb[0].mxu0
    %v858 = vadd.f32 %v794, %v857
    %v859 = vpop.f32.mrb[0].mxu0
    %860 = vdwg.mxu0
    %v861 = vxor.u32 %v847, 2147483648
    %v862 = vxor.u32 %v850, 2147483648
    %v863 = vxor.u32 %v855, 2147483648
    %v864 = vxor.u32 %v858, 2147483648
    %v865 = vmul.f32 %v861, 1.442695
    %v866 = vpow.pop %v865
    %v867 = vmul.f32 %v862, 1.442695
    %v868 = vpow.pop %v867
    %v869 = vmul.f32 %v863, 1.442695
    %v870 = vpow.pop %v869
    %v871 = vmul.f32 %v864, 1.442695
    %v872 = vpow.pop %v871
    %v873 = vadd.f32 %v866, 1.0
    %v874 = vadd.f32 %v868, 1.0
    %v875 = vadd.f32 %v870, 1.0
    %v876 = vadd.f32 %v872, 1.0
    %v877 = vrcp.pop %v873
    %v878 = vmul.f32 1.0, %v877
    %v879 = vrcp.pop %v874
    %v880 = vmul.f32 1.0, %v879
    %v881 = vrcp.pop %v875
    %v882 = vmul.f32 1.0, %v881
    %v883 = vrcp.pop %v876
    %v884 = vmul.f32 1.0, %v883
    %v885 = vld [vmem:[%s2 + $0x20] sm:$0xf]
    %v886 = vld [vmem:[%s2 + $0x24] sm:$0xf]
    %v887 = vld [vmem:[%s2 + $0x28] sm:$0xf]
    %v888 = vld [vmem:[%s2 + $0x2c] sm:$0xf]
    %v889 = vpack.c.bf16 %v880, %v878
    %v890 = vpack.c.bf16 %v884, %v882
    %v891 = vld [vmem:[%s5 + $0x40] sm:$0xff]
    %v892 = vld [vmem:[%s5 + $0x48] sm:$0xff]
    %v893 = vld [vmem:[%s5 + $0x50] sm:$0xff]
    %v894 = vld [vmem:[%s5 + $0x58] sm:$0xff]
    %896 = vset.pattern.permute.xlu0 0
    %897 = vperm.xlu0 %896, %v891
    %v898 = vpop.permute.xlu0 %897
    %901 = vset.pattern.permute.xlu0 0
    %902 = vperm.xlu0 %901, %v892
    %v903 = vpop.permute.xlu0 %902
    %906 = vset.pattern.permute.xlu0 0
    %907 = vperm.xlu0 %906, %v893
    %v908 = vpop.permute.xlu0 %907
    %911 = vset.pattern.permute.xlu0 0
    %912 = vperm.xlu0 %911, %v894
    %v913 = vpop.permute.xlu0 %912
    %v919 = vunpack.c.l.b16 %v885
    %v920 = vunpack.c.l.b16 %v886
    %v921 = vunpack.c.l.b16 %v887
    %v922 = vunpack.c.l.b16 %v888
    %v923 = vpack.c.b16 %v920, %v919
    %v924 = vpack.c.b16 %v922, %v921
    %v926 = vsel %vm507, %v923, 0
    %v929 = vsel %vm507, %v924, 0
    %931 = vmatprep.subr.bf16.mxu0 0
    %932 = vmatpush1.bf16.msra.mxu0 %v889
    %933 = vmatprep.subr.bf16.mxu0 0
    %934 = vmatpush1.bf16.msra.mxu0 %v890
    %935 = vmatprep.subr.bf16.mxu0 0
    %936 = vmatpush1.bf16.msra.mxu0 0
    %937 = vmatprep.subr.bf16.mxu0 0
    %938 = vmatpush1.bf16.msra.mxu0 0
    %939 = vmatprep.subr.bf16.mxu0 0
    %940 = vmatpush1.bf16.msra.mxu0 0
    %941 = vmatprep.subr.bf16.mxu0 0
    %942 = vmatpush1.bf16.msra.mxu0 0
    %943 = vmatprep.subr.bf16.mxu0 0
    %944 = vmatpush1.bf16.msra.mxu0 0
    %945 = vmatprep.subr.bf16.mxu0 0
    %946 = vmatpush1.bf16.msra.mxu0 0
    %947 = vmatprep.subr.bf16.mxu0 0
    %948 = vmatpush1.bf16.msra.mxu0 0
    %949 = vmatprep.subr.bf16.mxu0 0
    %950 = vmatpush1.bf16.msra.mxu0 0
    %951 = vmatprep.subr.bf16.mxu0 0
    %952 = vmatpush1.bf16.msra.mxu0 0
    %953 = vmatprep.subr.bf16.mxu0 0
    %954 = vmatpush1.bf16.msra.mxu0 0
    %955 = vmatprep.subr.bf16.mxu0 0
    %956 = vmatpush1.bf16.msra.mxu0 0
    %957 = vmatprep.subr.bf16.mxu0 0
    %958 = vmatpush1.bf16.msra.mxu0 0
    %959 = vmatprep.subr.bf16.mxu0 0
    %960 = vmatpush1.bf16.msra.mxu0 0
    %961 = vmatprep.subr.bf16.mxu0 0
    %962 = vmatpush1.bf16.msra.mxu0 0
    %963 = vmatprep.mubr.bf16.mxu0 0
    %964 = vmatmul.mubr.bf16.gmra.mrb[0].mxu0 %v926
    %v965 = vpop.f32.mrb[0].mxu0
    %v966 = vadd.f32 %v898, %v965
    %v967 = vpop.f32.mrb[0].mxu0
    %v968 = vpop.f32.mrb[0].mxu0
    %v969 = vadd.f32 %v903, %v968
    %v970 = vpop.f32.mrb[0].mxu0
    %971 = vmatprep.mubr.bf16.mxu0 0
    %972 = vmatmul.mubr.bf16.gmra.mrb[0].mxu0 %v929
    %v973 = vpop.f32.mrb[0].mxu0
    %v974 = vadd.f32 %v908, %v973
    %v975 = vpop.f32.mrb[0].mxu0
    %v976 = vpop.f32.mrb[0].mxu0
    %v977 = vadd.f32 %v913, %v976
    %v978 = vpop.f32.mrb[0].mxu0
    %979 = vdwg.mxu0
    %v980 = vxor.u32 %v966, 2147483648
    %v981 = vxor.u32 %v969, 2147483648
    %v982 = vxor.u32 %v974, 2147483648
    %v983 = vxor.u32 %v977, 2147483648
    %v984 = vmul.f32 %v980, 1.442695
    %v985 = vpow.pop %v984
    %v986 = vmul.f32 %v981, 1.442695
    %v987 = vpow.pop %v986
    %v988 = vmul.f32 %v982, 1.442695
    %v989 = vpow.pop %v988
    %v990 = vmul.f32 %v983, 1.442695
    %v991 = vpow.pop %v990
    %v992 = vadd.f32 %v985, 1.0
    %v993 = vadd.f32 %v987, 1.0
    %v994 = vadd.f32 %v989, 1.0
    %v995 = vadd.f32 %v991, 1.0
    %v996 = vrcp.pop %v992
    %v997 = vmul.f32 1.0, %v996
    %v998 = vrcp.pop %v993
    %v999 = vmul.f32 1.0, %v998
    %v1000 = vrcp.pop %v994
    %v1001 = vmul.f32 1.0, %v1000
    %v1002 = vrcp.pop %v995
    %v1003 = vmul.f32 1.0, %v1002
    %v1004 = vadd.f32 %v997, %v752
    %v1005 = vadd.f32 %v999, %v755
    %v1006 = vadd.f32 %v1001, %v760
    %v1007 = vadd.f32 %v1003, %v763
    %v1008 = vld [vmem:[%s2 + $0x30] sm:$0xf]
    %v1009 = vld [vmem:[%s2 + $0x34] sm:$0xf]
    %v1010 = vld [vmem:[%s2 + $0x38] sm:$0xf]
    %v1011 = vld [vmem:[%s2 + $0x3c] sm:$0xf]
    %v1012 = vpack.c.bf16 %v1005, %v1004
    %v1013 = vpack.c.bf16 %v1007, %v1006
    %v1014 = vld [vmem:[%s5 + $0x60] sm:$0xff]
    %v1015 = vld [vmem:[%s5 + $0x68] sm:$0xff]
    %v1016 = vld [vmem:[%s5 + $0x70] sm:$0xff]
    %v1017 = vld [vmem:[%s5 + $0x78] sm:$0xff]
    %1019 = vset.pattern.permute.xlu0 0
    %1020 = vperm.xlu0 %1019, %v1014
    %v1021 = vpop.permute.xlu0 %1020
    %1024 = vset.pattern.permute.xlu0 0
    %1025 = vperm.xlu0 %1024, %v1015
    %v1026 = vpop.permute.xlu0 %1025
    %1029 = vset.pattern.permute.xlu0 0
    %1030 = vperm.xlu0 %1029, %v1016
    %v1031 = vpop.permute.xlu0 %1030
    %1034 = vset.pattern.permute.xlu0 0
    %1035 = vperm.xlu0 %1034, %v1017
    %v1036 = vpop.permute.xlu0 %1035
    %v1042 = vunpack.c.l.b16 %v1008
    %v1043 = vunpack.c.l.b16 %v1009
    %v1044 = vunpack.c.l.b16 %v1010
    %v1045 = vunpack.c.l.b16 %v1011
    %v1046 = vpack.c.b16 %v1043, %v1042
    %v1047 = vpack.c.b16 %v1045, %v1044
    %v1049 = vsel %vm507, %v1046, 0
    %v1052 = vsel %vm507, %v1047, 0
    %1054 = vmatprep.subr.bf16.mxu0 0
    %1055 = vmatpush1.bf16.msra.mxu0 %v1012
    %1056 = vmatprep.subr.bf16.mxu0 0
    %1057 = vmatpush1.bf16.msra.mxu0 %v1013
    %1058 = vmatprep.subr.bf16.mxu0 0
    %1059 = vmatpush1.bf16.msra.mxu0 0
    %1060 = vmatprep.subr.bf16.mxu0 0
    %1061 = vmatpush1.bf16.msra.mxu0 0
    %1062 = vmatprep.subr.bf16.mxu0 0
    %1063 = vmatpush1.bf16.msra.mxu0 0
    %1064 = vmatprep.subr.bf16.mxu0 0
    %1065 = vmatpush1.bf16.msra.mxu0 0
    %1066 = vmatprep.subr.bf16.mxu0 0
    %1067 = vmatpush1.bf16.msra.mxu0 0
    %1068 = vmatprep.subr.bf16.mxu0 0
    %1069 = vmatpush1.bf16.msra.mxu0 0
    %1070 = vmatprep.subr.bf16.mxu0 0
    %1071 = vmatpush1.bf16.msra.mxu0 0
    %1072 = vmatprep.subr.bf16.mxu0 0
    %1073 = vmatpush1.bf16.msra.mxu0 0
    %1074 = vmatprep.subr.bf16.mxu0 0
    %1075 = vmatpush1.bf16.msra.mxu0 0
    %1076 = vmatprep.subr.bf16.mxu0 0
    %1077 = vmatpush1.bf16.msra.mxu0 0
    %1078 = vmatprep.subr.bf16.mxu0 0
    %1079 = vmatpush1.bf16.msra.mxu0 0
    %1080 = vmatprep.subr.bf16.mxu0 0
    %1081 = vmatpush1.bf16.msra.mxu0 0
    %1082 = vmatprep.subr.bf16.mxu0 0
    %1083 = vmatpush1.bf16.msra.mxu0 0
    %1084 = vmatprep.subr.bf16.mxu0 0
    %1085 = vmatpush1.bf16.msra.mxu0 0
    %1086 = vmatprep.mubr.bf16.mxu0 0
    %1087 = vmatmul.mubr.bf16.gmra.mrb[0].mxu0 %v1049
    %v1088 = vpop.f32.mrb[0].mxu0
    %v1089 = vadd.f32 %v1021, %v1088
    %v1090 = vpop.f32.mrb[0].mxu0
    %v1091 = vpop.f32.mrb[0].mxu0
    %v1092 = vadd.f32 %v1026, %v1091
    %v1093 = vpop.f32.mrb[0].mxu0
    %1094 = vmatprep.mubr.bf16.mxu0 0
    %1095 = vmatmul.mubr.bf16.gmra.mrb[0].mxu0 %v1052
    %v1096 = vpop.f32.mrb[0].mxu0
    %v1097 = vadd.f32 %v1031, %v1096
    %v1098 = vpop.f32.mrb[0].mxu0
    %v1099 = vpop.f32.mrb[0].mxu0
    %v1100 = vadd.f32 %v1036, %v1099
    %v1101 = vpop.f32.mrb[0].mxu0
    %1102 = vdwg.mxu0
    %v1103 = vxor.u32 %v1089, 2147483648
    %v1104 = vxor.u32 %v1092, 2147483648
    %v1105 = vxor.u32 %v1097, 2147483648
    %v1106 = vxor.u32 %v1100, 2147483648
    %v1107 = vmul.f32 %v1103, 1.442695
    %v1108 = vpow.pop %v1107
    %v1109 = vmul.f32 %v1104, 1.442695
    %v1110 = vpow.pop %v1109
    %v1111 = vmul.f32 %v1105, 1.442695
    %v1112 = vpow.pop %v1111
    %v1113 = vmul.f32 %v1106, 1.442695
    %v1114 = vpow.pop %v1113
    %v1115 = vadd.f32 %v1108, 1.0
    %v1116 = vadd.f32 %v1110, 1.0
    %v1117 = vadd.f32 %v1112, 1.0
    %v1118 = vadd.f32 %v1114, 1.0
    %v1119 = vrcp.pop %v1115
    %v1120 = vmul.f32 1.0, %v1119
    %v1121 = vrcp.pop %v1116
    %v1122 = vmul.f32 1.0, %v1121
    %v1123 = vrcp.pop %v1117
    %v1124 = vmul.f32 1.0, %v1123
    %v1125 = vrcp.pop %v1118
    %v1126 = vmul.f32 1.0, %v1125
    %v1127 = vld [vmem:[%s4] sm:$0x3]
    %v1128 = vpack.c.bf16 %v1122, %v1120
    %v1129 = vpack.c.bf16 %v1126, %v1124
    %v1130 = vld [vmem:[%s7] sm:$0x7]
    %1132 = vset.pattern.permute.xlu0 0
    %1133 = vperm.xlu0 %1132, %v1130
    %v1134 = vpop.permute.xlu0 %1133
    %v1137 = vsel %vm507, %v1127, 0
    %1139 = vmatprep.subr.bf16.mxu0 0
    %1140 = vmatpush1.bf16.msra.mxu0 %v1128
    %1141 = vmatprep.subr.bf16.mxu0 0
    %1142 = vmatpush1.bf16.msra.mxu0 %v1129
    %1143 = vmatprep.subr.bf16.mxu0 0
    %1144 = vmatpush1.bf16.msra.mxu0 0
    %1145 = vmatprep.subr.bf16.mxu0 0
    %1146 = vmatpush1.bf16.msra.mxu0 0
    %1147 = vmatprep.subr.bf16.mxu0 0
    %1148 = vmatpush1.bf16.msra.mxu0 0
    %1149 = vmatprep.subr.bf16.mxu0 0
    %1150 = vmatpush1.bf16.msra.mxu0 0
    %1151 = vmatprep.subr.bf16.mxu0 0
    %1152 = vmatpush1.bf16.msra.mxu0 0
    %1153 = vmatprep.subr.bf16.mxu0 0
    %1154 = vmatpush1.bf16.msra.mxu0 0
    %1155 = vmatprep.subr.bf16.mxu0 0
    %1156 = vmatpush1.bf16.msra.mxu0 0
    %1157 = vmatprep.subr.bf16.mxu0 0
    %1158 = vmatpush1.bf16.msra.mxu0 0
    %1159 = vmatprep.subr.bf16.mxu0 0
    %1160 = vmatpush1.bf16.msra.mxu0 0
    %1161 = vmatprep.subr.bf16.mxu0 0
    %1162 = vmatpush1.bf16.msra.mxu0 0
    %1163 = vmatprep.subr.bf16.mxu0 0
    %1164 = vmatpush1.bf16.msra.mxu0 0
    %1165 = vmatprep.subr.bf16.mxu0 0
    %1166 = vmatpush1.bf16.msra.mxu0 0
    %1167 = vmatprep.subr.bf16.mxu0 0
    %1168 = vmatpush1.bf16.msra.mxu0 0
    %1169 = vmatprep.subr.bf16.mxu0 0
    %1170 = vmatpush1.bf16.msra.mxu0 0
    %1171 = vmatprep.mubr.bf16.mxu0 0
    %1172 = vmatmul.mubr.bf16.gmra.mrb[0].mxu0 %v1137
    %v1173 = vpop.f32.mrb[0].mxu0
    %v1174 = vadd.f32 %v1134, %v1173
    %v1175 = vpop.f32.mrb[0].mxu0
    %v1176 = vpop.f32.mrb[0].mxu0
    %v1177 = vpop.f32.mrb[0].mxu0
    %1178 = vdwg.mxu0
    %v1180 = vrot.slane %v31, 3
    %v1182 = vsub.f32 %v1174, %v1180
    %v1184 = vrot.slane %v1182, 1
    %v1186 = vmul.f32 %v31, %v1184
    %v1187 = vmul.f32 %v32, %v1184
    %v1189 = vrot.slane %v1187, 1
    %v1191 = vadd.f32 %v1186, %v1189
    %v1192 = vrot.slane %v1187, 2
    %v1194 = vadd.f32 %v1191, %v1192
    %1195 = vst [vmem:[#allocation2 - $0x7] sm:$0x80] %v1194
    %v1196 = vrot.slane %v1182, 6
    %v1198 = vmul.f32 %v32, %v1196
    %v1200 = vrot.slane %v1198, 1
    %v1202 = vadd.f32 %v1198, %v1200
    %v1203 = vrot.slane %v1198, 2
    %v1205 = vadd.f32 %v1202, %v1203
    %1206 = vst [vmem:[#allocation2 - $0x1] sm:$0x4] %v1205
    %v1207 = vrot.slane %v1182, 3
    %v1209 = vmul.f32 %v32, %v1207
    %v1211 = vrot.slane %v1209, 1
    %v1213 = vadd.f32 %v1209, %v1211
    %v1214 = vrot.slane %v1209, 2
    %v1216 = vadd.f32 %v1213, %v1214
    %1217 = vst [vmem:[#allocation2 - $0x3] sm:$0x20] %v1216
    // Predicated region
    $region34: #{tpu_custom_call.1} parent=1 // pred_check
      _
    $region35: #{tpu_custom_call.1} parent=1 // pred_check_branch
      %1219 = sbr.rel (0) target = $region37
    $region36: #{tpu_custom_call.1} parent=1 // pred_region
      %s1221 = ssub.s32 64, 64
      %1222 = vsyncadd [#allocation3], %s1221
      %s1224 = sshll.u32 [#allocation2], 4
      %s1225 = int_to_ptr.vmem [resolvable:$true] %s1224
      %1227 = dma.vmem_to_hbm [thread:$0]  %s1225, 64, %s8, [#allocation3]
    $region37: #{tpu_custom_call.1} parent=1 // pred_fallthru
      _
    // Predicated region
    $region38: #{tpu_custom_call.1} parent=1 // pred_check
      _
    $region39: #{tpu_custom_call.1} parent=1 // pred_check_branch
      %1229 = sbr.rel (0) target = $region41
    $region40: #{tpu_custom_call.1} parent=1 // pred_region
      %1230 = dma.done [#allocation3], 64
    $region41: #{tpu_custom_call.1} parent=1 // pred_fallthru
      _
    %1231 = vsyncpa [#allocation3], 1

</llo_original>
